<compile_context>
chip_gen: v5e
topology: v5e:2x2
jax: 0.10.0
libtpu: 0.0.40
codegen_flags: <defaults>
</compile_context>

<pallas_src>
import jax
import jax.numpy as jnp
from jax.experimental import pallas as pl
from jax.experimental.pallas import tpu as pltpu


def _round_up(x: int, m: int) -> int:
    return ((x + m - 1) // m) * m


def _make_actor_kernel(n_layers: int, matmul_dtype=None):
    """Fused MLP kernel for `n_layers` Linear layers (transposed layout).

    Ref order: (x, W0, b0, W1, b1, ..., W_{L-1}, b_{L-1}, out)
      x   : [in_features, batch_tile]
      W_i : [out_i, in_i]   (PyTorch layout; already cast if matmul_dtype set)
      b_i : [out_i, 1]      (float32)
      out : [out_actions, batch_tile]
    ReLU after every layer except the last (matches create_mlp with
    output_dim > 0).
    """

    def kernel(*refs):
        x_ref = refs[0]
        out_ref = refs[-1]
        param_refs = refs[1:-1]

        h = x_ref[...]  # f32 activations, [features, batch] -> lane-dense
        for i in range(n_layers):
            w = param_refs[2 * i][...]        # [out_i, in_i]
            b = param_refs[2 * i + 1][...]    # [out_i, 1] -> broadcasts over lanes
            rhs = h.astype(matmul_dtype) if matmul_dtype is not None else h
            h = jnp.dot(w, rhs, preferred_element_type=jnp.float32) + b
            if i < n_layers - 1:
                h = jnp.maximum(h, 0.0)       # ReLU on hidden layers only
        out_ref[...] = h.astype(out_ref.dtype)  # unmasked lane-dense store

    return kernel


def actor_forward(x, params, *, batch_tile=None, matmul_dtype=None,
                  gridless_max_batch=4096):
    """Run the Actor MLP forward pass with a single fused Pallas kernel.

    x:      [B, in_features] float32 (PyTorch convention).
    params: list of (W [out_features, in_features], b [out_features]) per
            Linear layer (PyTorch nn.Linear layout).
    batch_tile: rows per grid step for the batch-tiled path (auto if None;
                must be a multiple of 128 when tiling, since batch is the
                lane axis).
    matmul_dtype: optional dtype (e.g. jnp.bfloat16) for MXU operands; weights
                  are cast once here, accumulation/activations stay float32.
                  Leave None at these shapes (MXU is not the bottleneck).
    """
    n_layers = len(params)
    batch, in_features = x.shape
    out_dim = params[-1][0].shape[0]

    # Wrapper-side layout plumbing: batch -> lane axis.
    x_t = x.T  # [in_features, batch]

    flat_params = []
    for w, b in params:
        w_arr = w.astype(matmul_dtype) if matmul_dtype is not None else w
        flat_params.append(w_arr)              # [out, in]
        flat_params.append(b.reshape(-1, 1))   # [out, 1], keep f32

    kernel = _make_actor_kernel(n_layers, matmul_dtype=matmul_dtype)

    # Advisory cost estimate so XLA schedules this tiny call sensibly.
    dims = [in_features] + [w.shape[0] for w, _ in params]
    flops = 2 * batch * sum(dims[i] * dims[i + 1] for i in range(n_layers))
    param_bytes = sum(int(w.size) * w.dtype.itemsize + int(b.size) * 4
                      for w, b in params)
    bytes_accessed = int(x.size) * x.dtype.itemsize + batch * out_dim * 4 + param_bytes
    cost = pl.CostEstimate(flops=int(flops), transcendentals=0,
                           bytes_accessed=int(bytes_accessed))

    # Tile selection (see perf notes in header).
    if batch_tile is None:
        if batch <= gridless_max_batch:
            use_tiled = False
            tm = batch
        else:
            use_tiled = True
            # ~2 parallel steps keeps both v7x TensorCores busy; capped so the
            # activation working set stays far below the scoped-VMEM limit.
            tm = min(_round_up(pl.cdiv(batch, 2), 128), 32768)
    else:
        tm = batch_tile
        use_tiled = batch > batch_tile
        if use_tiled:
            assert tm % 128 == 0, "batch_tile must be a multiple of 128 (lane axis)"

    if not use_tiled:
        # Gridless path: no grid, no pipelining machinery — everything (a few
        # KB/MB) is placed in VMEM and the fused body runs once.
        vmem = pl.BlockSpec(memory_space=pltpu.MemorySpace.VMEM)
        out_t = pl.pallas_call(
            kernel,
            in_specs=[vmem] * (1 + len(flat_params)),
            out_specs=vmem,
            out_shape=jax.ShapeDtypeStruct((out_dim, batch), jnp.float32),
            cost_estimate=cost,
        )(x_t, *flat_params)
        return out_t.T

    # Tiled path: pad batch (lane axis) to a multiple of tm so every grid step
    # sees a full block (rows are independent; padded rows are sliced off).
    batch_pad = _round_up(batch, tm)
    if batch_pad != batch:
        x_t = jnp.pad(x_t, ((0, 0), (0, batch_pad - batch)))

    in_specs = [pl.BlockSpec((in_features, tm), lambda i: (0, i))]
    for a in flat_params:
        # Constant index_map -> weight/bias block is identical every step and
        # stays resident in VMEM across the grid.
        in_specs.append(pl.BlockSpec(a.shape, lambda i: (0, 0)))
    out_specs = pl.BlockSpec((out_dim, tm), lambda i: (0, i))

    out_t = pl.pallas_call(
        kernel,
        grid=(batch_pad // tm,),
        in_specs=in_specs,
        out_specs=out_specs,
        out_shape=jax.ShapeDtypeStruct((out_dim, batch_pad), jnp.float32),
        compiler_params=pltpu.CompilerParams(
            dimension_semantics=("parallel",),  # megacore sharding on v7x
        ),
        cost_estimate=cost,
    )(x_t, *flat_params)
    return out_t[:, :batch].T


def init_actor_params(key, in_features, out_actions, hidden_layers):
    """PyTorch nn.Linear-style params: W [out, in], b [out], U(-1/sqrt(fan_in), +)."""
    dims = [in_features] + list(hidden_layers) + [out_actions]
    params = []
    for i in range(len(dims) - 1):
        key, kw, kb = jax.random.split(key, 3)
        fan_in = dims[i]
        bound = 1.0 / jnp.sqrt(jnp.asarray(fan_in, jnp.float32))
        w = jax.random.uniform(
            kw, (dims[i + 1], dims[i]), jnp.float32, minval=-bound, maxval=bound
        )
        b = jax.random.uniform(
            kb, (dims[i + 1],), jnp.float32, minval=-bound, maxval=bound
        )
        params.append((w, b))
    return params


def actor_forward_ref(x, params):
    """Pure-JAX reference (PyTorch semantics: h @ W.T + b, ReLU on hiddens)."""
    h = x
    for i, (w, b) in enumerate(params):
        h = h @ w.T + b
        if i < len(params) - 1:
            h = jnp.maximum(h, 0.0)
    return h


if __name__ == "__main__":
    # Shapes consistent with Actor(in_features=16, out_actions=8,
    # activation=nn.ReLU, hidden_layers=[32, 32]).
    batch = 4
    in_features = 16
    out_actions = 8
    hidden_layers = [32, 32]

    key = jax.random.PRNGKey(0)
    key, kx = jax.random.split(key)
    x = jax.random.normal(kx, (batch, in_features), jnp.float32)
    params = init_actor_params(key, in_features, out_actions, hidden_layers)

    # Small-batch (gridless, VMEM-resident) path.
    out = jax.block_until_ready(actor_forward(x, params))
    ref = actor_forward_ref(x, params)
    assert out.shape == (batch, out_actions)
    assert jnp.allclose(out, ref, atol=1e-5, rtol=1e-5), "small-batch mismatch"

    # Batch-tiled path: 2 parallel grid steps, weights resident in VMEM.
    big_batch = 1024
    key, kx2 = jax.random.split(key)
    xb = jax.random.normal(kx2, (big_batch, in_features), jnp.float32)
    outb = jax.block_until_ready(actor_forward(xb, params, batch_tile=512))
    refb = actor_forward_ref(xb, params)
    assert outb.shape == (big_batch, out_actions)
    assert jnp.allclose(outb, refb, atol=1e-4, rtol=1e-4), "tiled-batch mismatch"

    # Ragged batch exercising the pad-to-tile path (1000 -> padded to 1024).
    rag_batch = 1000
    key, kx3 = jax.random.split(key)
    xr = jax.random.normal(kx3, (rag_batch, in_features), jnp.float32)
    outr = jax.block_until_ready(actor_forward(xr, params, batch_tile=512))
    refr = actor_forward_ref(xr, params)
    assert outr.shape == (rag_batch, out_actions)
    assert jnp.allclose(outr, refr, atol=1e-4, rtol=1e-4), "ragged-batch mismatch"

    # TODO(synk): the bf16 matmul_dtype path is supported but intentionally not
    # used/tested here (per perf review it is a net loss at these shapes).

    print("KERNEL_OK")
</pallas_src>

<mosaic_0001>
module attributes {stable_mosaic.version = 11 : i64} {
  func.func @kernel(%arg0: memref<16x4xf32, #tpu.memory_space<vmem>>, %arg1: memref<32x16xf32, #tpu.memory_space<vmem>>, %arg2: memref<32x1xf32, #tpu.memory_space<vmem>>, %arg3: memref<32x32xf32, #tpu.memory_space<vmem>>, %arg4: memref<32x1xf32, #tpu.memory_space<vmem>>, %arg5: memref<8x32xf32, #tpu.memory_space<vmem>>, %arg6: memref<8x1xf32, #tpu.memory_space<vmem>>, %arg7: memref<8x4xf32, #tpu.memory_space<vmem>>) attributes {dimension_semantics = [], scalar_prefetch = 0 : i64, scratch_operands = 0 : i64, tpu.core_type = #tpu.core_type<tc>} {
    %c0 = arith.constant 0 : index
    %c0_0 = arith.constant 0 : index
    %0 = vector.load %arg0[%c0, %c0_0] : memref<16x4xf32, #tpu.memory_space<vmem>>, vector<16x4xf32>
    %c0_1 = arith.constant 0 : index
    %c0_2 = arith.constant 0 : index
    %1 = vector.load %arg1[%c0_1, %c0_2] : memref<32x16xf32, #tpu.memory_space<vmem>>, vector<32x16xf32>
    %c0_3 = arith.constant 0 : index
    %c0_4 = arith.constant 0 : index
    %2 = vector.load %arg2[%c0_3, %c0_4] : memref<32x1xf32, #tpu.memory_space<vmem>>, vector<32x1xf32>
    %cst = arith.constant dense<0.000000e+00> : vector<32x4xf32>
    %3 = tpu.matmul %1, %0, %cst {dimension_numbers = #tpu.dot_dimension_numbers<[1], [0], [0], [1], [0, 0, 1, 1], [], []>} : vector<32x16xf32>, vector<16x4xf32>, vector<32x4xf32> -> vector<32x4xf32>
    %4 = vector.broadcast %2 : vector<32x1xf32> to vector<32x4xf32>
    %5 = arith.addf %3, %4 : vector<32x4xf32>
    %cst_5 = arith.constant 0.000000e+00 : f32
    %6 = vector.broadcast %cst_5 : f32 to vector<32x4xf32>
    %7 = arith.maximumf %5, %6 : vector<32x4xf32>
    %c0_6 = arith.constant 0 : index
    %c0_7 = arith.constant 0 : index
    %8 = vector.load %arg3[%c0_6, %c0_7] : memref<32x32xf32, #tpu.memory_space<vmem>>, vector<32x32xf32>
    %c0_8 = arith.constant 0 : index
    %c0_9 = arith.constant 0 : index
    %9 = vector.load %arg4[%c0_8, %c0_9] : memref<32x1xf32, #tpu.memory_space<vmem>>, vector<32x1xf32>
    %cst_10 = arith.constant dense<0.000000e+00> : vector<32x4xf32>
    %10 = tpu.matmul %8, %7, %cst_10 {dimension_numbers = #tpu.dot_dimension_numbers<[1], [0], [0], [1], [0, 0, 1, 1], [], []>} : vector<32x32xf32>, vector<32x4xf32>, vector<32x4xf32> -> vector<32x4xf32>
    %11 = vector.broadcast %9 : vector<32x1xf32> to vector<32x4xf32>
    %12 = arith.addf %10, %11 : vector<32x4xf32>
    %cst_11 = arith.constant 0.000000e+00 : f32
    %13 = vector.broadcast %cst_11 : f32 to vector<32x4xf32>
    %14 = arith.maximumf %12, %13 : vector<32x4xf32>
    %c0_12 = arith.constant 0 : index
    %c0_13 = arith.constant 0 : index
    %15 = vector.load %arg5[%c0_12, %c0_13] : memref<8x32xf32, #tpu.memory_space<vmem>>, vector<8x32xf32>
    %c0_14 = arith.constant 0 : index
    %c0_15 = arith.constant 0 : index
    %16 = vector.load %arg6[%c0_14, %c0_15] : memref<8x1xf32, #tpu.memory_space<vmem>>, vector<8x1xf32>
    %cst_16 = arith.constant dense<0.000000e+00> : vector<8x4xf32>
    %17 = tpu.matmul %15, %14, %cst_16 {dimension_numbers = #tpu.dot_dimension_numbers<[1], [0], [0], [1], [0, 0, 1, 1], [], []>} : vector<8x32xf32>, vector<32x4xf32>, vector<8x4xf32> -> vector<8x4xf32>
    %18 = vector.broadcast %16 : vector<8x1xf32> to vector<8x4xf32>
    %19 = arith.addf %17, %18 : vector<8x4xf32>
    %c0_17 = arith.constant 0 : index
    %c0_18 = arith.constant 0 : index
    %20 = vector.load %arg7[%c0_17, %c0_18] : memref<8x4xf32, #tpu.memory_space<vmem>>, vector<8x4xf32>
    tpu.vector_store %arg7[%c0_17, %c0_18], %19 {strides = array<i32>} : memref<8x4xf32, #tpu.memory_space<vmem>>, vector<8x4xf32>,
    return
  }
}

</mosaic_0001>

<llo_original>
// kernel: tpu_custom_call.1
$region0: #{tpu_custom_call.1}
  #allocation0 [shape = 'u32[]', space=smem, size = 0x4, offset = 0x4, fixed_abs, tag = 'smem constant byte address 0x4 - core index']
  #allocation1 [shape = 'u32[72,128]{1,0:T(1,128)}', space=vmem, size = 0x9000, scoped, tag = 'internal scratch']
  %s0 = inlined_call_operand.vmem [shape: f32[16,4], index: 0, kind: input, shape index: {}]
  %s1 = inlined_call_operand.vmem [shape: f32[32,16], index: 1, kind: input, shape index: {}]
  %s2 = inlined_call_operand.vmem [shape: f32[32,1], index: 2, kind: input, shape index: {}]
  %s3 = inlined_call_operand.vmem [shape: f32[32,32], index: 3, kind: input, shape index: {}]
  %s4 = inlined_call_operand.vmem [shape: f32[32,1], index: 4, kind: input, shape index: {}]
  %s5 = inlined_call_operand.vmem [shape: f32[8,32], index: 5, kind: input, shape index: {}]
  %s6 = inlined_call_operand.vmem [shape: f32[8,1], index: 6, kind: input, shape index: {}]
  %s7 = inlined_call_operand.vmem [shape: f32[8,4], index: 7, kind: output, shape index: {}]
  %s8 = sld [smem:[#allocation0]]
  $region38: #{tpu_custom_call.1} parent=0
    _
  %s10 = ssub.s32 1, %s8
  %s11 = scalar_select 0, %s10, %s8
  // Predicated region
  $region2: #{tpu_custom_call.1} parent=0 // pred_check
    _
  $region3: #{tpu_custom_call.1} parent=0 // pred_check_branch
    %13 = sbr.rel (0) target = $region5
  $region4: #{tpu_custom_call.1} parent=0 // pred_region
    _
  $region5: #{tpu_custom_call.1} parent=0 // pred_fallthru
    _
  // Predicated region
  $region6: #{tpu_custom_call.1} parent=0 // pred_check
    _
  $region7: #{tpu_custom_call.1} parent=0 // pred_check_branch
    %15 = sbr.rel (0) target = $region9
  $region8: #{tpu_custom_call.1} parent=0 // pred_region
    _
  $region9: #{tpu_custom_call.1} parent=0 // pred_fallthru
    _
  // Predicated region
  $region10: #{tpu_custom_call.1} parent=0 // pred_check
    _
  $region11: #{tpu_custom_call.1} parent=0 // pred_check_branch
    %17 = sbr.rel (0) target = $region13
  $region12: #{tpu_custom_call.1} parent=0 // pred_region
    _
  $region13: #{tpu_custom_call.1} parent=0 // pred_fallthru
    _
  // Predicated region
  $region14: #{tpu_custom_call.1} parent=0 // pred_check
    _
  $region15: #{tpu_custom_call.1} parent=0 // pred_check_branch
    %19 = sbr.rel (0) target = $region17
  $region16: #{tpu_custom_call.1} parent=0 // pred_region
    _
  $region17: #{tpu_custom_call.1} parent=0 // pred_fallthru
    _
  // Predicated region
  $region18: #{tpu_custom_call.1} parent=0 // pred_check
    _
  $region19: #{tpu_custom_call.1} parent=0 // pred_check_branch
    %21 = sbr.rel (0) target = $region21
  $region20: #{tpu_custom_call.1} parent=0 // pred_region
    _
  $region21: #{tpu_custom_call.1} parent=0 // pred_fallthru
    _
  // Predicated region
  $region22: #{tpu_custom_call.1} parent=0 // pred_check
    _
  $region23: #{tpu_custom_call.1} parent=0 // pred_check_branch
    %23 = sbr.rel (0) target = $region25
  $region24: #{tpu_custom_call.1} parent=0 // pred_region
    _
  $region25: #{tpu_custom_call.1} parent=0 // pred_fallthru
    _
  // Predicated region
  $region26: #{tpu_custom_call.1} parent=0 // pred_check
    _
  $region27: #{tpu_custom_call.1} parent=0 // pred_check_branch
    %25 = sbr.rel (0) target = $region29
  $region28: #{tpu_custom_call.1} parent=0 // pred_region
    _
  $region29: #{tpu_custom_call.1} parent=0 // pred_fallthru
    _
  %v26 = vld [vmem:[%s0] sm:$0xff]
  %v27 = vld [vmem:[%s0 + $0x8] sm:$0xff]
  %v28 = vld [vmem:[%s1] sm:$0xff]
  %v29 = vld [vmem:[%s1 + $0x8] sm:$0xff]
  %v30 = vld [vmem:[%s1 + $0x10] sm:$0xff]
  %v31 = vld [vmem:[%s1 + $0x18] sm:$0xff]
  %v32 = vld [vmem:[%s2] sm:$0xff]
  %v33 = vld [vmem:[%s2 + $0x8] sm:$0xff]
  %v34 = vld [vmem:[%s2 + $0x10] sm:$0xff]
  %v35 = vld [vmem:[%s2 + $0x18] sm:$0xff]
  %37 = vset.pattern.permute.xlu0 0
  %38 = vperm.xlu0 %37, %v32
  %v39 = vpop.permute.xlu0 %38
  %42 = vset.pattern.permute.xlu0 0
  %43 = vperm.xlu0 %42, %v33
  %v44 = vpop.permute.xlu0 %43
  %47 = vset.pattern.permute.xlu0 0
  %48 = vperm.xlu0 %47, %v34
  %v49 = vpop.permute.xlu0 %48
  %52 = vset.pattern.permute.xlu0 0
  %53 = vperm.xlu0 %52, %v35
  %v54 = vpop.permute.xlu0 %53
  %vm56 = vcmask 130048
  %v58 = vsel %vm56, %v28, 0
  %v61 = vsel %vm56, %v29, 0
  %v64 = vsel %vm56, %v30, 0
  %v67 = vsel %vm56, %v31, 0
  %69 = vmatpush.msra.mxu0 0.0
  %70 = vmatpush.msra.mxu0 0.0
  %71 = vmatpush.msra.mxu0 0.0
  %72 = vmatpush.msra.mxu0 0.0
  %73 = vmatpush.msra.mxu0 0.0
  %74 = vmatpush.msra.mxu0 0.0
  %75 = vmatpush.msra.mxu0 0.0
  %76 = vmatpush.msra.mxu0 0.0
  %77 = vmatpush.msra.mxu0 0.0
  %78 = vmatpush.msra.mxu0 0.0
  %79 = vmatpush.msra.mxu0 0.0
  %80 = vmatpush.msra.mxu0 0.0
  %81 = vmatpush.msra.mxu0 0.0
  %82 = vmatpush.msra.mxu0 0.0
  %83 = vmatpush.msra.mxu0 %v27
  %84 = vmatpush.msra.mxu0 %v26
  %85 = vmatmul.f32.gmra.mxu0 %v58
  %v86 = vpop.f32.mrf.mxu0
  %v87 = vadd.f32 %v39, %v86
  %88 = vmatmul.f32.gmra.mxu0 %v61
  %v89 = vpop.f32.mrf.mxu0
  %v90 = vadd.f32 %v44, %v89
  %91 = vmatmul.f32.gmra.mxu0 %v64
  %v92 = vpop.f32.mrf.mxu0
  %v93 = vadd.f32 %v49, %v92
  %94 = vmatmul.f32.gmra.mxu0 %v67
  %v95 = vpop.f32.mrf.mxu0
  %v96 = vadd.f32 %v54, %v95
  %97 = vdwg.mxu0
  %v98 = vmax.f32 %v87, 0.0
  %v99 = vmax.f32 %v90, 0.0
  %v100 = vmax.f32 %v93, 0.0
  %v101 = vmax.f32 %v96, 0.0
  %v102 = vld [vmem:[%s3] sm:$0xff]
  %v103 = vld [vmem:[%s3 + $0x8] sm:$0xff]
  %v104 = vld [vmem:[%s3 + $0x10] sm:$0xff]
  %v105 = vld [vmem:[%s3 + $0x18] sm:$0xff]
  %v106 = vld [vmem:[%s4] sm:$0xff]
  %v107 = vld [vmem:[%s4 + $0x8] sm:$0xff]
  %v108 = vld [vmem:[%s4 + $0x10] sm:$0xff]
  %v109 = vld [vmem:[%s4 + $0x18] sm:$0xff]
  %111 = vset.pattern.permute.xlu0 0
  %112 = vperm.xlu0 %111, %v106
  %v113 = vpop.permute.xlu0 %112
  %116 = vset.pattern.permute.xlu0 0
  %117 = vperm.xlu0 %116, %v107
  %v118 = vpop.permute.xlu0 %117
  %121 = vset.pattern.permute.xlu0 0
  %122 = vperm.xlu0 %121, %v108
  %v123 = vpop.permute.xlu0 %122
  %126 = vset.pattern.permute.xlu0 0
  %127 = vperm.xlu0 %126, %v109
  %v128 = vpop.permute.xlu0 %127
  %vm130 = vcmask 261120
  %v132 = vsel %vm130, %v102, 0
  %v135 = vsel %vm130, %v103, 0
  %v138 = vsel %vm130, %v104, 0
  %v141 = vsel %vm130, %v105, 0
  %143 = vmatpush.msra.mxu0 0.0
  %144 = vmatpush.msra.mxu0 0.0
  %145 = vmatpush.msra.mxu0 0.0
  %146 = vmatpush.msra.mxu0 0.0
  %147 = vmatpush.msra.mxu0 0.0
  %148 = vmatpush.msra.mxu0 0.0
  %149 = vmatpush.msra.mxu0 0.0
  %150 = vmatpush.msra.mxu0 0.0
  %151 = vmatpush.msra.mxu0 0.0
  %152 = vmatpush.msra.mxu0 0.0
  %153 = vmatpush.msra.mxu0 0.0
  %154 = vmatpush.msra.mxu0 0.0
  %155 = vmatpush.msra.mxu0 %v101
  %156 = vmatpush.msra.mxu0 %v100
  %157 = vmatpush.msra.mxu0 %v99
  %158 = vmatpush.msra.mxu0 %v98
  %159 = vmatmul.f32.gmra.mxu0 %v132
  %v160 = vpop.f32.mrf.mxu0
  %v161 = vadd.f32 %v113, %v160
  %162 = vmatmul.f32.gmra.mxu0 %v135
  %v163 = vpop.f32.mrf.mxu0
  %v164 = vadd.f32 %v118, %v163
  %165 = vmatmul.f32.gmra.mxu0 %v138
  %v166 = vpop.f32.mrf.mxu0
  %v167 = vadd.f32 %v123, %v166
  %168 = vmatmul.f32.gmra.mxu0 %v141
  %v169 = vpop.f32.mrf.mxu0
  %v170 = vadd.f32 %v128, %v169
  %171 = vdwg.mxu0
  %v172 = vmax.f32 %v161, 0.0
  %v173 = vmax.f32 %v164, 0.0
  %v174 = vmax.f32 %v167, 0.0
  %v175 = vmax.f32 %v170, 0.0
  %v176 = vld [vmem:[%s5] sm:$0xff]
  %v177 = vld [vmem:[%s6] sm:$0xff]
  %179 = vset.pattern.permute.xlu0 0
  %180 = vperm.xlu0 %179, %v177
  %v181 = vpop.permute.xlu0 %180
  %v184 = vsel %vm130, %v176, 0
  %186 = vmatpush.msra.mxu0 0.0
  %187 = vmatpush.msra.mxu0 0.0
  %188 = vmatpush.msra.mxu0 0.0
  %189 = vmatpush.msra.mxu0 0.0
  %190 = vmatpush.msra.mxu0 0.0
  %191 = vmatpush.msra.mxu0 0.0
  %192 = vmatpush.msra.mxu0 0.0
  %193 = vmatpush.msra.mxu0 0.0
  %194 = vmatpush.msra.mxu0 0.0
  %195 = vmatpush.msra.mxu0 0.0
  %196 = vmatpush.msra.mxu0 0.0
  %197 = vmatpush.msra.mxu0 0.0
  %198 = vmatpush.msra.mxu0 %v175
  %199 = vmatpush.msra.mxu0 %v174
  %200 = vmatpush.msra.mxu0 %v173
  %201 = vmatpush.msra.mxu0 %v172
  %202 = vmatmul.f32.gmra.mxu0 %v184
  %v203 = vpop.f32.mrf.mxu0
  %v204 = vadd.f32 %v181, %v203
  %205 = vdwg.mxu0
  %vm206 = vcmask 31744
  %207 = vst.msk [vmem:[%s7] sm:$0xff] %vm206, %v204
  // Predicated region
  $region30: #{tpu_custom_call.1} parent=0 // pred_check
    _
  $region31: #{tpu_custom_call.1} parent=0 // pred_check_branch
    %209 = sbr.rel (0) target = $region33
  $region32: #{tpu_custom_call.1} parent=0 // pred_region
    _
  $region33: #{tpu_custom_call.1} parent=0 // pred_fallthru
    _
  // Predicated region
  $region34: #{tpu_custom_call.1} parent=0 // pred_check
    _
  $region35: #{tpu_custom_call.1} parent=0 // pred_check_branch
    %211 = sbr.rel (0) target = $region37
  $region36: #{tpu_custom_call.1} parent=0 // pred_region
    _
  $region37: #{tpu_custom_call.1} parent=0 // pred_fallthru
    _

</llo_original>
